<compile_context>
chip_gen: v5e
topology: v5e:2x2
jax: 0.10.0
libtpu: 0.0.40
codegen_flags: <defaults>
</compile_context>

<pallas_src>
import functools
import math

import jax
import jax.numpy as jnp
from jax.experimental import pallas as pl
from jax.experimental.pallas import tpu as pltpu


def _round_up(x: int, m: int) -> int:
    return ((x + m - 1) // m) * m


def _make_fused_mlp_kernel(num_layers: int):
    """Builds a kernel: x -> (Linear -> ReLU)*(n-1) -> Linear, all in VMEM."""

    def kernel(x_ref, *refs):
        # refs = (w1, b1, w2, b2, ..., wn, bn, o_ref)
        o_ref = refs[-1]
        acc = x_ref[...].astype(jnp.float32)
        for i in range(num_layers):
            w = refs[2 * i][...]
            b = refs[2 * i + 1][...].astype(jnp.float32)  # (1, N_pad) broadcast
            # MXU matmul with f32 accumulation; epilogue stays in f32
            # (v5e-safe; also correct if params are stored in bf16).
            acc = jnp.dot(acc.astype(w.dtype), w,
                          preferred_element_type=jnp.float32)
            acc = acc + b
            if i != num_layers - 1:
                acc = jnp.maximum(acc, 0.0)
        o_ref[...] = acc.astype(o_ref.dtype)

    return kernel


def init_dense_net_params(key, input_size, num_classes, layers, dtype=jnp.float32):
    """Deterministic init matching torch.nn.Linear default U(-1/sqrt(fan_in), ...).

    Weights are stored as [in, out] (transpose of PyTorch's [out, in]).
    For v6e/v7x bandwidth you may pass dtype=jnp.bfloat16; the kernel still
    accumulates and applies bias/ReLU in f32.
    """
    nodes_per_layer = list(layers) + [num_classes]
    params = []
    prev = input_size
    for out_dim in nodes_per_layer:
        key, kw, kb = jax.random.split(key, 3)
        bound = 1.0 / math.sqrt(prev)
        w = jax.random.uniform(kw, (prev, out_dim), jnp.float32, -bound, bound)
        b = jax.random.uniform(kb, (out_dim,), jnp.float32, -bound, bound)
        params.append((w.astype(dtype), b.astype(dtype)))
        prev = out_dim
    return params


@functools.partial(jax.jit, static_argnames=("block_rows",))
def dense_neural_net_forward(params, x, *, block_rows: int = 256):
    """Forward pass of DenseNeuralNet as ONE fused Pallas kernel.

    x: [B, input_size]; params: list of (W [in, out], b [out]).
    Returns [B, num_classes].
    """
    # TODO(synk): BatchNorm1d / Dropout branches (disabled by the module
    # defaults batch_norm=False, dropout_prob=0.0) are not implemented.
    B, K = x.shape
    num_layers = len(params)
    num_classes = params[-1][0].shape[1]

    # ---- Lane-dense padding: every feature dim -> multiple of 128 ----------
    K_pad = _round_up(K, 128)
    dims_pad = [K_pad]
    padded_params = []
    for (w, b) in params:
        kin, n = w.shape
        kin_pad = dims_pad[-1]
        n_pad = _round_up(n, 128)
        w_pad = jnp.zeros((kin_pad, n_pad), w.dtype).at[:kin, :n].set(w)
        b_pad = jnp.zeros((1, n_pad), b.dtype).at[0, :n].set(b)
        padded_params.append((w_pad, b_pad))
        dims_pad.append(n_pad)
    N_out_pad = dims_pad[-1]

    # ---- Batch tiling: tm rows per grid step (multiple of 8 for f32) -------
    tm = min(block_rows, _round_up(B, 8))
    tm = _round_up(tm, 8)
    B_pad = _round_up(B, tm)
    x_pad = jnp.zeros((B_pad, K_pad), x.dtype).at[:B, :K].set(x)
    grid = (B_pad // tm,)

    # ---- Specs: activation tile moves with the grid; weights stay resident -
    in_specs = [pl.BlockSpec((tm, K_pad), lambda i: (i, 0))]
    flat_args = [x_pad]
    for (w_pad, b_pad) in padded_params:
        in_specs.append(pl.BlockSpec(w_pad.shape, lambda i: (0, 0)))
        in_specs.append(pl.BlockSpec(b_pad.shape, lambda i: (0, 0)))
        flat_args.append(w_pad)
        flat_args.append(b_pad)
    out_specs = pl.BlockSpec((tm, N_out_pad), lambda i: (i, 0))

    # ---- VMEM budget: tiles + params, double-buffered, with headroom -------
    param_bytes = sum(w.size * w.dtype.itemsize + b.size * b.dtype.itemsize
                      for (w, b) in padded_params)
    tile_bytes = (tm * K_pad + tm * N_out_pad) * x.dtype.itemsize
    # biggest intermediate activation tile lives in vregs/VMEM during compute
    act_bytes = tm * max(dims_pad) * 4
    vmem_needed = 2 * (tile_bytes + param_bytes) + act_bytes
    vmem_limit = min(max(int(vmem_needed * 1.25), 32 * 1024 * 1024),
                     64 * 1024 * 1024)  # cap at v7x per-TC physical VMEM

    # ---- Advisory cost estimate for XLA's scheduler ------------------------
    flops = 2 * B_pad * sum(dims_pad[i] * dims_pad[i + 1]
                            for i in range(num_layers))
    bytes_accessed = (x_pad.size * x_pad.dtype.itemsize
                      + param_bytes
                      + B_pad * N_out_pad * x.dtype.itemsize)
    cost = pl.CostEstimate(flops=flops, transcendentals=0,
                           bytes_accessed=bytes_accessed)

    out_pad = pl.pallas_call(
        _make_fused_mlp_kernel(num_layers),
        out_shape=jax.ShapeDtypeStruct((B_pad, N_out_pad), x.dtype),
        grid=grid,
        in_specs=in_specs,
        out_specs=out_specs,
        compiler_params=pltpu.CompilerParams(
            dimension_semantics=("parallel",),   # shard batch across TCs (v7x)
            vmem_limit_bytes=vmem_limit),
        cost_estimate=cost,
    )(*flat_args)

    return out_pad[:B, :num_classes]


if __name__ == "__main__":
    key = jax.random.PRNGKey(0)
    key, kx, kp = jax.random.split(key, 3)

    # Small shapes consistent with the module's forward: x is [batch, input_size].
    batch, input_size = 8, 32
    hidden_layers = [64, 32]
    num_classes = 16

    x = jax.random.normal(kx, (batch, input_size), jnp.float32)
    params = init_dense_net_params(kp, input_size, num_classes, hidden_layers)

    out = dense_neural_net_forward(params, x)
    out = jax.block_until_ready(out)
    assert out.shape == (batch, num_classes), out.shape

    # Pure-JAX reference check of the same forward semantics.
    ref = x
    for i, (w, b) in enumerate(params):
        ref = ref @ w + b
        if i != len(params) - 1:
            ref = jnp.maximum(ref, 0.0)
    assert jnp.allclose(out, ref, atol=1e-4, rtol=1e-4), (
        float(jnp.max(jnp.abs(out - ref))))

    print("KERNEL_OK")
</pallas_src>

<mosaic_0001>
module attributes {stable_mosaic.version = 11 : i64} {
  func.func @kernel(%arg0: i32, %arg1: memref<8x128xf32, #tpu.memory_space<vmem>>, %arg2: memref<128x128xf32, #tpu.memory_space<vmem>>, %arg3: memref<1x128xf32, #tpu.memory_space<vmem>>, %arg4: memref<128x128xf32, #tpu.memory_space<vmem>>, %arg5: memref<1x128xf32, #tpu.memory_space<vmem>>, %arg6: memref<128x128xf32, #tpu.memory_space<vmem>>, %arg7: memref<1x128xf32, #tpu.memory_space<vmem>>, %arg8: memref<8x128xf32, #tpu.memory_space<vmem>>) attributes {dimension_semantics = [#tpu.dimension_semantics<parallel>], iteration_bounds = array<i64: 1>, scalar_prefetch = 0 : i64, scratch_operands = 0 : i64, tpu.core_type = #tpu.core_type<tc>, window_params = [{transform_indices = @transform_0, window_bounds = array<i64: 8, 128>}, {pipeline_mode = #tpu.pipeline_mode<synchronous>, transform_indices = @transform_1, window_bounds = array<i64: 128, 128>}, {pipeline_mode = #tpu.pipeline_mode<synchronous>, transform_indices = @transform_2, window_bounds = array<i64: 1, 128>}, {pipeline_mode = #tpu.pipeline_mode<synchronous>, transform_indices = @transform_3, window_bounds = array<i64: 128, 128>}, {pipeline_mode = #tpu.pipeline_mode<synchronous>, transform_indices = @transform_4, window_bounds = array<i64: 1, 128>}, {pipeline_mode = #tpu.pipeline_mode<synchronous>, transform_indices = @transform_5, window_bounds = array<i64: 128, 128>}, {pipeline_mode = #tpu.pipeline_mode<synchronous>, transform_indices = @transform_6, window_bounds = array<i64: 1, 128>}, {transform_indices = @transform_7, window_bounds = array<i64: 8, 128>}]} {
    %c0 = arith.constant 0 : index
    %c0_0 = arith.constant 0 : index
    %0 = vector.load %arg1[%c0, %c0_0] : memref<8x128xf32, #tpu.memory_space<vmem>>, vector<8x128xf32>
    %c0_1 = arith.constant 0 : index
    %c0_2 = arith.constant 0 : index
    %1 = vector.load %arg2[%c0_1, %c0_2] : memref<128x128xf32, #tpu.memory_space<vmem>>, vector<128x128xf32>
    %c0_3 = arith.constant 0 : index
    %c0_4 = arith.constant 0 : index
    %2 = vector.load %arg3[%c0_3, %c0_4] : memref<1x128xf32, #tpu.memory_space<vmem>>, vector<1x128xf32>
    %cst = arith.constant dense<0.000000e+00> : vector<8x128xf32>
    %3 = tpu.matmul %0, %1, %cst {dimension_numbers = #tpu.dot_dimension_numbers<[1], [0], [0], [1], [0, 0, 1, 1], [], []>} : vector<8x128xf32>, vector<128x128xf32>, vector<8x128xf32> -> vector<8x128xf32>
    %4 = vector.broadcast %2 : vector<1x128xf32> to vector<8x128xf32>
    %5 = arith.addf %3, %4 : vector<8x128xf32>
    %cst_5 = arith.constant 0.000000e+00 : f32
    %6 = vector.broadcast %cst_5 : f32 to vector<8x128xf32>
    %7 = arith.maximumf %5, %6 : vector<8x128xf32>
    %c0_6 = arith.constant 0 : index
    %c0_7 = arith.constant 0 : index
    %8 = vector.load %arg4[%c0_6, %c0_7] : memref<128x128xf32, #tpu.memory_space<vmem>>, vector<128x128xf32>
    %c0_8 = arith.constant 0 : index
    %c0_9 = arith.constant 0 : index
    %9 = vector.load %arg5[%c0_8, %c0_9] : memref<1x128xf32, #tpu.memory_space<vmem>>, vector<1x128xf32>
    %cst_10 = arith.constant dense<0.000000e+00> : vector<8x128xf32>
    %10 = tpu.matmul %7, %8, %cst_10 {dimension_numbers = #tpu.dot_dimension_numbers<[1], [0], [0], [1], [0, 0, 1, 1], [], []>} : vector<8x128xf32>, vector<128x128xf32>, vector<8x128xf32> -> vector<8x128xf32>
    %11 = vector.broadcast %9 : vector<1x128xf32> to vector<8x128xf32>
    %12 = arith.addf %10, %11 : vector<8x128xf32>
    %cst_11 = arith.constant 0.000000e+00 : f32
    %13 = vector.broadcast %cst_11 : f32 to vector<8x128xf32>
    %14 = arith.maximumf %12, %13 : vector<8x128xf32>
    %c0_12 = arith.constant 0 : index
    %c0_13 = arith.constant 0 : index
    %15 = vector.load %arg6[%c0_12, %c0_13] : memref<128x128xf32, #tpu.memory_space<vmem>>, vector<128x128xf32>
    %c0_14 = arith.constant 0 : index
    %c0_15 = arith.constant 0 : index
    %16 = vector.load %arg7[%c0_14, %c0_15] : memref<1x128xf32, #tpu.memory_space<vmem>>, vector<1x128xf32>
    %cst_16 = arith.constant dense<0.000000e+00> : vector<8x128xf32>
    %17 = tpu.matmul %14, %15, %cst_16 {dimension_numbers = #tpu.dot_dimension_numbers<[1], [0], [0], [1], [0, 0, 1, 1], [], []>} : vector<8x128xf32>, vector<128x128xf32>, vector<8x128xf32> -> vector<8x128xf32>
    %18 = vector.broadcast %16 : vector<1x128xf32> to vector<8x128xf32>
    %19 = arith.addf %17, %18 : vector<8x128xf32>
    %c0_17 = arith.constant 0 : index
    %c0_18 = arith.constant 0 : index
    %20 = vector.load %arg8[%c0_17, %c0_18] : memref<8x128xf32, #tpu.memory_space<vmem>>, vector<8x128xf32>
    tpu.vector_store %arg8[%c0_17, %c0_18], %19 {strides = array<i32>} : memref<8x128xf32, #tpu.memory_space<vmem>>, vector<8x128xf32>,
    return
  }
  func.func @transform_0(%arg0: i32) -> (i32, i32) {
    %c0_i32 = arith.constant 0 : i32
    %c0_i32_0 = arith.constant 0 : i32
    return %arg0, %c0_i32 : i32, i32
  }
  func.func @transform_1(%arg0: i32) -> (i32, i32) {
    %c0_i32 = arith.constant 0 : i32
    %c0_i32_0 = arith.constant 0 : i32
    %c0_i32_1 = arith.constant 0 : i32
    return %c0_i32, %c0_i32_0 : i32, i32
  }
  func.func @transform_2(%arg0: i32) -> (i32, i32) {
    %c0_i32 = arith.constant 0 : i32
    %c0_i32_0 = arith.constant 0 : i32
    %c0_i32_1 = arith.constant 0 : i32
    return %c0_i32, %c0_i32_0 : i32, i32
  }
  func.func @transform_3(%arg0: i32) -> (i32, i32) {
    %c0_i32 = arith.constant 0 : i32
    %c0_i32_0 = arith.constant 0 : i32
    %c0_i32_1 = arith.constant 0 : i32
    return %c0_i32, %c0_i32_0 : i32, i32
  }
  func.func @transform_4(%arg0: i32) -> (i32, i32) {
    %c0_i32 = arith.constant 0 : i32
    %c0_i32_0 = arith.constant 0 : i32
    %c0_i32_1 = arith.constant 0 : i32
    return %c0_i32, %c0_i32_0 : i32, i32
  }
  func.func @transform_5(%arg0: i32) -> (i32, i32) {
    %c0_i32 = arith.constant 0 : i32
    %c0_i32_0 = arith.constant 0 : i32
    %c0_i32_1 = arith.constant 0 : i32
    return %c0_i32, %c0_i32_0 : i32, i32
  }
  func.func @transform_6(%arg0: i32) -> (i32, i32) {
    %c0_i32 = arith.constant 0 : i32
    %c0_i32_0 = arith.constant 0 : i32
    %c0_i32_1 = arith.constant 0 : i32
    return %c0_i32, %c0_i32_0 : i32, i32
  }
  func.func @transform_7(%arg0: i32) -> (i32, i32) {
    %c0_i32 = arith.constant 0 : i32
    %c0_i32_0 = arith.constant 0 : i32
    return %arg0, %c0_i32 : i32, i32
  }
}

</mosaic_0001>

<llo_original>
// kernel: dense_neural_net_forward.1
$region0: #{dense_neural_net_forward.1}
  #allocation0 [shape = 'u32[]', space=smem, size = 0x4, offset = 0x4, fixed_abs, tag = 'smem constant byte address 0x4 - core index']
  #allocation1 [shape = 'u32[72,128]{1,0:T(1,128)}', space=vmem, size = 0x9000, scoped, tag = 'internal scratch']
  %s0 = inlined_call_operand.vmem [shape: f32[8,128], index: 0, kind: input, shape index: {}]
  %s1 = inlined_call_operand.vmem [shape: f32[128,128], index: 1, kind: input, shape index: {}]
  %s2 = inlined_call_operand.vmem [shape: f32[1,128], index: 2, kind: input, shape index: {}]
  %s3 = inlined_call_operand.vmem [shape: f32[128,128], index: 3, kind: input, shape index: {}]
  %s4 = inlined_call_operand.vmem [shape: f32[1,128], index: 4, kind: input, shape index: {}]
  %s5 = inlined_call_operand.vmem [shape: f32[128,128], index: 5, kind: input, shape index: {}]
  %s6 = inlined_call_operand.vmem [shape: f32[1,128], index: 6, kind: input, shape index: {}]
  %s7 = inlined_call_operand.hbm [shape: f32[8,128], index: 7, kind: output, shape index: {}]
  %s8 = sld [smem:[#allocation0]]
  $region38: #{dense_neural_net_forward.1} parent=0
    _
  %s10 = ssub.s32 1, %s8
  %s11 = scalar_select 0, %s10, %s8
  $region1: #{dense_neural_net_forward.1} parent=0
    #allocation2 [shape = 'u8[4096]{0}', space=vmem, size = 0x1000, scoped, tag = 'output window, operand 0, single buffered']
    #allocation3 [shape = 's32[1]{0}', space=sflag, size = 0x4, scoped, tag = 'scoped memory for dense_neural_net_forward.1']
    %12 = vsyncpa [#allocation3], 0
    // Predicated region
    $region2: #{dense_neural_net_forward.1} parent=1 // pred_check
      _
    $region3: #{dense_neural_net_forward.1} parent=1 // pred_check_branch
      %14 = sbr.rel (0) target = $region5
    $region4: #{dense_neural_net_forward.1} parent=1 // pred_region
      _
    $region5: #{dense_neural_net_forward.1} parent=1 // pred_fallthru
      _
    // Predicated region
    $region6: #{dense_neural_net_forward.1} parent=1 // pred_check
      _
    $region7: #{dense_neural_net_forward.1} parent=1 // pred_check_branch
      %16 = sbr.rel (0) target = $region9
    $region8: #{dense_neural_net_forward.1} parent=1 // pred_region
      _
    $region9: #{dense_neural_net_forward.1} parent=1 // pred_fallthru
      _
    // Predicated region
    $region10: #{dense_neural_net_forward.1} parent=1 // pred_check
      _
    $region11: #{dense_neural_net_forward.1} parent=1 // pred_check_branch
      %18 = sbr.rel (0) target = $region13
    $region12: #{dense_neural_net_forward.1} parent=1 // pred_region
      _
    $region13: #{dense_neural_net_forward.1} parent=1 // pred_fallthru
      _
    // Predicated region
    $region14: #{dense_neural_net_forward.1} parent=1 // pred_check
      _
    $region15: #{dense_neural_net_forward.1} parent=1 // pred_check_branch
      %20 = sbr.rel (0) target = $region17
    $region16: #{dense_neural_net_forward.1} parent=1 // pred_region
      _
    $region17: #{dense_neural_net_forward.1} parent=1 // pred_fallthru
      _
    // Predicated region
    $region18: #{dense_neural_net_forward.1} parent=1 // pred_check
      _
    $region19: #{dense_neural_net_forward.1} parent=1 // pred_check_branch
      %22 = sbr.rel (0) target = $region21
    $region20: #{dense_neural_net_forward.1} parent=1 // pred_region
      _
    $region21: #{dense_neural_net_forward.1} parent=1 // pred_fallthru
      _
    // Predicated region
    $region22: #{dense_neural_net_forward.1} parent=1 // pred_check
      _
    $region23: #{dense_neural_net_forward.1} parent=1 // pred_check_branch
      %24 = sbr.rel (0) target = $region25
    $region24: #{dense_neural_net_forward.1} parent=1 // pred_region
      _
    $region25: #{dense_neural_net_forward.1} parent=1 // pred_fallthru
      _
    // Predicated region
    $region26: #{dense_neural_net_forward.1} parent=1 // pred_check
      _
    $region27: #{dense_neural_net_forward.1} parent=1 // pred_check_branch
      %26 = sbr.rel (0) target = $region29
    $region28: #{dense_neural_net_forward.1} parent=1 // pred_region
      _
    $region29: #{dense_neural_net_forward.1} parent=1 // pred_fallthru
      _
    %v27 = vld [vmem:[%s0] sm:$0xff]
    %v28 = vld [vmem:[%s1] sm:$0xff]
    %v29 = vld [vmem:[%s1 + $0x8] sm:$0xff]
    %v30 = vld [vmem:[%s1 + $0x10] sm:$0xff]
    %v31 = vld [vmem:[%s1 + $0x18] sm:$0xff]
    %v32 = vld [vmem:[%s1 + $0x20] sm:$0xff]
    %v33 = vld [vmem:[%s1 + $0x28] sm:$0xff]
    %v34 = vld [vmem:[%s1 + $0x30] sm:$0xff]
    %v35 = vld [vmem:[%s1 + $0x38] sm:$0xff]
    %v36 = vld [vmem:[%s1 + $0x40] sm:$0xff]
    %v37 = vld [vmem:[%s1 + $0x48] sm:$0xff]
    %v38 = vld [vmem:[%s1 + $0x50] sm:$0xff]
    %v39 = vld [vmem:[%s1 + $0x58] sm:$0xff]
    %v40 = vld [vmem:[%s1 + $0x60] sm:$0xff]
    %v41 = vld [vmem:[%s1 + $0x68] sm:$0xff]
    %v42 = vld [vmem:[%s1 + $0x70] sm:$0xff]
    %v43 = vld [vmem:[%s1 + $0x78] sm:$0xff]
    %v44 = vld [vmem:[%s2] sm:$0x1]
    %v46 = vperm.slane %v44, 0
    %48 = vmatpush.msra.mxu0 %v43
    %49 = vmatpush.msra.mxu0 %v42
    %50 = vmatpush.msra.mxu0 %v41
    %51 = vmatpush.msra.mxu0 %v40
    %52 = vmatpush.msra.mxu0 %v39
    %53 = vmatpush.msra.mxu0 %v38
    %54 = vmatpush.msra.mxu0 %v37
    %55 = vmatpush.msra.mxu0 %v36
    %56 = vmatpush.msra.mxu0 %v35
    %57 = vmatpush.msra.mxu0 %v34
    %58 = vmatpush.msra.mxu0 %v33
    %59 = vmatpush.msra.mxu0 %v32
    %60 = vmatpush.msra.mxu0 %v31
    %61 = vmatpush.msra.mxu0 %v30
    %62 = vmatpush.msra.mxu0 %v29
    %63 = vmatpush.msra.mxu0 %v28
    %64 = vmatmul.f32.gmra.mxu0 %v27
    %v65 = vpop.f32.mrf.mxu0
    %v66 = vadd.f32 %v46, %v65
    %67 = vdwg.mxu0
    %v68 = vmax.f32 %v66, 0.0
    %v69 = vld [vmem:[%s3] sm:$0xff]
    %v70 = vld [vmem:[%s3 + $0x8] sm:$0xff]
    %v71 = vld [vmem:[%s3 + $0x10] sm:$0xff]
    %v72 = vld [vmem:[%s3 + $0x18] sm:$0xff]
    %v73 = vld [vmem:[%s3 + $0x20] sm:$0xff]
    %v74 = vld [vmem:[%s3 + $0x28] sm:$0xff]
    %v75 = vld [vmem:[%s3 + $0x30] sm:$0xff]
    %v76 = vld [vmem:[%s3 + $0x38] sm:$0xff]
    %v77 = vld [vmem:[%s3 + $0x40] sm:$0xff]
    %v78 = vld [vmem:[%s3 + $0x48] sm:$0xff]
    %v79 = vld [vmem:[%s3 + $0x50] sm:$0xff]
    %v80 = vld [vmem:[%s3 + $0x58] sm:$0xff]
    %v81 = vld [vmem:[%s3 + $0x60] sm:$0xff]
    %v82 = vld [vmem:[%s3 + $0x68] sm:$0xff]
    %v83 = vld [vmem:[%s3 + $0x70] sm:$0xff]
    %v84 = vld [vmem:[%s3 + $0x78] sm:$0xff]
    %v85 = vld [vmem:[%s4] sm:$0x1]
    %v87 = vperm.slane %v85, 0
    %89 = vmatpush.msra.mxu0 %v84
    %90 = vmatpush.msra.mxu0 %v83
    %91 = vmatpush.msra.mxu0 %v82
    %92 = vmatpush.msra.mxu0 %v81
    %93 = vmatpush.msra.mxu0 %v80
    %94 = vmatpush.msra.mxu0 %v79
    %95 = vmatpush.msra.mxu0 %v78
    %96 = vmatpush.msra.mxu0 %v77
    %97 = vmatpush.msra.mxu0 %v76
    %98 = vmatpush.msra.mxu0 %v75
    %99 = vmatpush.msra.mxu0 %v74
    %100 = vmatpush.msra.mxu0 %v73
    %101 = vmatpush.msra.mxu0 %v72
    %102 = vmatpush.msra.mxu0 %v71
    %103 = vmatpush.msra.mxu0 %v70
    %104 = vmatpush.msra.mxu0 %v69
    %105 = vmatmul.f32.gmra.mxu0 %v68
    %v106 = vpop.f32.mrf.mxu0
    %v107 = vadd.f32 %v87, %v106
    %108 = vdwg.mxu0
    %v109 = vmax.f32 %v107, 0.0
    %v110 = vld [vmem:[%s5] sm:$0xff]
    %v111 = vld [vmem:[%s5 + $0x8] sm:$0xff]
    %v112 = vld [vmem:[%s5 + $0x10] sm:$0xff]
    %v113 = vld [vmem:[%s5 + $0x18] sm:$0xff]
    %v114 = vld [vmem:[%s5 + $0x20] sm:$0xff]
    %v115 = vld [vmem:[%s5 + $0x28] sm:$0xff]
    %v116 = vld [vmem:[%s5 + $0x30] sm:$0xff]
    %v117 = vld [vmem:[%s5 + $0x38] sm:$0xff]
    %v118 = vld [vmem:[%s5 + $0x40] sm:$0xff]
    %v119 = vld [vmem:[%s5 + $0x48] sm:$0xff]
    %v120 = vld [vmem:[%s5 + $0x50] sm:$0xff]
    %v121 = vld [vmem:[%s5 + $0x58] sm:$0xff]
    %v122 = vld [vmem:[%s5 + $0x60] sm:$0xff]
    %v123 = vld [vmem:[%s5 + $0x68] sm:$0xff]
    %v124 = vld [vmem:[%s5 + $0x70] sm:$0xff]
    %v125 = vld [vmem:[%s5 + $0x78] sm:$0xff]
    %v126 = vld [vmem:[%s6] sm:$0x1]
    %v128 = vperm.slane %v126, 0
    %130 = vmatpush.msra.mxu0 %v125
    %131 = vmatpush.msra.mxu0 %v124
    %132 = vmatpush.msra.mxu0 %v123
    %133 = vmatpush.msra.mxu0 %v122
    %134 = vmatpush.msra.mxu0 %v121
    %135 = vmatpush.msra.mxu0 %v120
    %136 = vmatpush.msra.mxu0 %v119
    %137 = vmatpush.msra.mxu0 %v118
    %138 = vmatpush.msra.mxu0 %v117
    %139 = vmatpush.msra.mxu0 %v116
    %140 = vmatpush.msra.mxu0 %v115
    %141 = vmatpush.msra.mxu0 %v114
    %142 = vmatpush.msra.mxu0 %v113
    %143 = vmatpush.msra.mxu0 %v112
    %144 = vmatpush.msra.mxu0 %v111
    %145 = vmatpush.msra.mxu0 %v110
    %146 = vmatmul.f32.gmra.mxu0 %v109
    %v147 = vpop.f32.mrf.mxu0
    %v148 = vadd.f32 %v128, %v147
    %149 = vdwg.mxu0
    %150 = vst [vmem:[#allocation2] sm:$0xff] %v148
    // Predicated region
    $region30: #{dense_neural_net_forward.1} parent=1 // pred_check
      _
    $region31: #{dense_neural_net_forward.1} parent=1 // pred_check_branch
      %152 = sbr.rel (0) target = $region33
    $region32: #{dense_neural_net_forward.1} parent=1 // pred_region
      %154 = vsyncadd [#allocation3], 0
      %s156 = sshll.u32 [#allocation2], 4
      %s157 = int_to_ptr.vmem [resolvable:$true] %s156
      %s158 = sshll.u32 %s7, 4
      %s159 = int_to_ptr.hbm [resolvable:$true] %s158
      %161 = dma.vmem_to_hbm [thread:$0]  %s157, 128, %s159, [#allocation3]
    $region33: #{dense_neural_net_forward.1} parent=1 // pred_fallthru
      _
    // Predicated region
    $region34: #{dense_neural_net_forward.1} parent=1 // pred_check
      _
    $region35: #{dense_neural_net_forward.1} parent=1 // pred_check_branch
      %163 = sbr.rel (0) target = $region37
    $region36: #{dense_neural_net_forward.1} parent=1 // pred_region
      %165 = dma.done [#allocation3], 128
    $region37: #{dense_neural_net_forward.1} parent=1 // pred_fallthru
      _
    %166 = vsyncpa [#allocation3], 1

</llo_original>
